<compile_context>
chip_gen: v7x
topology: tpu7x:2x2x1
jax: 0.10.0
libtpu: 0.0.40
codegen_flags: <defaults>
</compile_context>

<pallas_src>
import functools
import math

import jax
import jax.numpy as jnp
from jax.experimental import pallas as pl
from jax.experimental.pallas import tpu as pltpu


def _round_up(x, m):
    return ((x + m - 1) // m) * m


def _linear_kernel(x_ref, w_ref, b_ref, o_ref, *, compute_dtype):
    # One (tm x tn) output tile: MXU matmul (f32 accumulator) + VPU bias add.
    x = x_ref[...]
    if compute_dtype is not None and x.dtype != compute_dtype:
        x = x.astype(compute_dtype)  # per-tile cast, hidden under the MXU
    acc = jnp.dot(x, w_ref[...], preferred_element_type=jnp.float32)
    o_ref[...] = (acc + b_ref[...].astype(jnp.float32)).astype(o_ref.dtype)


def local_wrapper_forward(x, w_t, b, *, tm=512, tn=None,
                          compute_dtype=jnp.bfloat16, out_dtype=None):
    """Pallas implementation of LocalWrapper.forward for local_net = Linear.

    x   : [B, S, H]  activations (f32 or bf16)
    w_t : [H, H]     weight, PyTorch layout transposed to [in, out]
    b   : [H]        bias
    tm  : row-tile size (rows per grid step); 512 is a good default on
          v6e/v7x, 256 is plenty on v5e's 4x128^2 MXU.
    tn  : output-column tile; defaults to the full (padded) H when the weight
          fits resident in VMEM, otherwise 512 (streamed-W fallback).
    compute_dtype : MXU input dtype.  Default bf16 (f32 accumulation); results
          then differ from an exact f32 reference at the ~1e-2 level.  Pass
          jnp.float32 for exact parity.
    out_dtype : output dtype (defaults to x.dtype); pass jnp.bfloat16 on v7x
          to halve writeback traffic when the consumer tolerates it.
    """
    B, S, H = x.shape
    M = B * S
    out_dtype = out_dtype if out_dtype is not None else x.dtype

    x2d = x.reshape(M, H)  # free when x is contiguous (keep H on the lane axis)

    # ---- padding (only when actually needed) --------------------------------
    need_h_pad = (H % 128) != 0
    need_m_pad = (M % 8) != 0
    h_pad = _round_up(H, 128)
    m_pad = _round_up(M, 8)

    w_dtype = compute_dtype if compute_dtype is not None else w_t.dtype
    if need_h_pad:
        # Padded W rows MUST be zero (they meet the padded K columns of x).
        wp = jnp.zeros((h_pad, h_pad), w_dtype).at[:H, :H].set(w_t.astype(w_dtype))
        bp = jnp.zeros((1, h_pad), jnp.float32).at[0, :H].set(b.astype(jnp.float32))
    else:
        wp = w_t.astype(w_dtype)                      # no-op if already w_dtype
        bp = b.astype(jnp.float32).reshape(1, H)

    if need_h_pad or need_m_pad:
        xp = jnp.zeros((m_pad, h_pad), x2d.dtype).at[:M, :H].set(x2d)
    else:
        xp = x2d                                      # fast path: no HBM pass

    # ---- tiling --------------------------------------------------------------
    tm = max(8, min(_round_up(tm, 8), m_pad))
    # Prefer >= 2 row tiles when enough rows exist so both v7x TCs get work.
    if m_pad < 2 * tm and m_pad >= 16:
        tm = _round_up(pl.cdiv(m_pad, 2), 8)
    grid_m = pl.cdiv(m_pad, tm)                       # ragged final tile is OK

    w_item = jnp.dtype(wp.dtype).itemsize
    if tn is None:
        # Keep W resident when it fits comfortably in v7x's 64 MiB VMEM;
        # otherwise stream it N-tile by N-tile (x tile reused across N).
        tn = h_pad if h_pad * h_pad * w_item <= 24 * 1024 * 1024 else 512
    tn = min(_round_up(tn, 128), h_pad)
    grid_n = pl.cdiv(h_pad, tn)
    resident_w = (grid_n == 1)

    # Single-buffer the grid-invariant W/bias (halves their VMEM footprint).
    spec_kw = {}
    if resident_w and hasattr(pl, "Buffered"):
        spec_kw = dict(pipeline_mode=pl.Buffered(1))

    x_spec = pl.BlockSpec((tm, h_pad), lambda i, j: (i, 0))
    w_spec = pl.BlockSpec((h_pad, tn), lambda i, j: (0, j), **spec_kw)
    b_spec = pl.BlockSpec((1, tn), lambda i, j: (0, j), **spec_kw)
    o_spec = pl.BlockSpec((tm, tn), lambda i, j: (i, j))

    # ---- VMEM budget (explicit, deterministic) -------------------------------
    x_item = jnp.dtype(xp.dtype).itemsize
    o_item = jnp.dtype(out_dtype).itemsize
    w_bufs = 1 if resident_w else 2
    working_set = (h_pad * tn * w_item * w_bufs          # W
                   + 8 * tn * 4 * w_bufs                 # bias (sublane-padded)
                   + 2 * tm * h_pad * x_item             # x double-buffered
                   + 2 * tm * tn * o_item)               # out double-buffered
    vmem_limit = int(min(64 * 1024 * 1024,
                         max(int(working_set * 1.3) + (4 << 20), 16 << 20)))

    # Cost estimate on TRUE shapes (padded shapes over-report by up to 16x).
    cost = pl.CostEstimate(
        flops=2 * M * H * H,
        bytes_accessed=(M * H * x_item + H * H * w_item + H * 4 + M * H * o_item),
        transcendentals=0)

    out2d = pl.pallas_call(
        functools.partial(_linear_kernel, compute_dtype=compute_dtype),
        out_shape=jax.ShapeDtypeStruct((m_pad, h_pad), out_dtype),
        grid_spec=pltpu.PrefetchScalarGridSpec(
            num_scalar_prefetch=0,
            grid=(grid_m, grid_n),
            in_specs=[x_spec, w_spec, b_spec],
            out_specs=o_spec,
        ),
        compiler_params=pltpu.CompilerParams(
            dimension_semantics=("parallel", "arbitrary"),
            vmem_limit_bytes=vmem_limit),
        cost_estimate=cost,
    )(xp, wp, bp)

    if need_h_pad or need_m_pad:
        out2d = out2d[:M, :H]
    return out2d.reshape(B, S, H)


def init_local_net_params(key, hidden):
    """Deterministic nn.Linear(hidden, hidden) init (PyTorch default scheme)."""
    k_w, k_b = jax.random.split(key)
    bound = 1.0 / math.sqrt(hidden)
    # PyTorch stores W as [out, in]; we keep the transpose [in, out].
    w_t = jax.random.uniform(k_w, (hidden, hidden), jnp.float32, -bound, bound)
    b = jax.random.uniform(k_b, (hidden,), jnp.float32, -bound, bound)
    return w_t, b


if __name__ == "__main__":
    key = jax.random.PRNGKey(0)
    ks = jax.random.split(key, 6)

    # 1) Small BERT-style demo (unaligned H=32): pad path, bf16 default + f32 parity.
    B, S, H = 2, 8, 32
    x = jax.random.normal(ks[0], (B, S, H), jnp.float32)
    w_t, bias = init_local_net_params(ks[1], H)
    ref = x.reshape(B * S, H) @ w_t + bias[None, :]

    out_bf16 = jax.block_until_ready(local_wrapper_forward(x, w_t, bias))
    assert out_bf16.shape == (B, S, H)
    assert jnp.allclose(out_bf16.reshape(-1, H), ref, atol=5e-2, rtol=5e-2)

    out_f32 = jax.block_until_ready(
        local_wrapper_forward(x, w_t, bias, compute_dtype=jnp.float32))
    assert jnp.allclose(out_f32.reshape(-1, H), ref, atol=1e-5, rtol=1e-5)

    # 2) Aligned fast path (no pad / no slice): M % 8 == 0, H % 128 == 0,
    #    resident single-buffered W, 2 row tiles.
    B2, S2, H2 = 2, 64, 128
    x2 = jax.random.normal(ks[2], (B2, S2, H2), jnp.float32)
    w2, b2 = init_local_net_params(ks[3], H2)
    ref2 = x2.reshape(-1, H2) @ w2 + b2[None, :]
    out2 = jax.block_until_ready(
        local_wrapper_forward(x2, w2, b2, tm=64, compute_dtype=jnp.float32))
    assert jnp.allclose(out2.reshape(-1, H2), ref2, atol=1e-3, rtol=1e-3)

    # 3) Ragged row count + multi N-tile (streamed-W fallback path).
    B3, S3, H3 = 2, 37, 256
    x3 = jax.random.normal(ks[4], (B3, S3, H3), jnp.float32)
    w3, b3 = init_local_net_params(ks[5], H3)
    ref3 = x3.reshape(-1, H3) @ w3 + b3[None, :]
    out3 = jax.block_until_ready(
        local_wrapper_forward(x3, w3, b3, tm=32, tn=128,
                              compute_dtype=jnp.float32))
    assert jnp.allclose(out3.reshape(-1, H3), ref3, atol=1e-3, rtol=1e-3)

    print("KERNEL_OK")
</pallas_src>

<mosaic_0001>
module attributes {stable_mosaic.version = 11 : i64} {
  func.func @_linear_kernel(%arg0: i32, %arg1: i32, %arg2: memref<8x128xf32, #tpu.memory_space<vmem>>, %arg3: memref<128x128xbf16, #tpu.memory_space<vmem>>, %arg4: memref<1x128xf32, #tpu.memory_space<vmem>>, %arg5: memref<8x128xf32, #tpu.memory_space<vmem>>) attributes {dimension_semantics = [#tpu.dimension_semantics<parallel>, #tpu.dimension_semantics<arbitrary>], iteration_bounds = array<i64: 2, 1>, scalar_prefetch = 0 : i64, scratch_operands = 0 : i64, tpu.core_type = #tpu.core_type<tc>, window_params = [{transform_indices = @transform_0, window_bounds = array<i64: 8, 128>}, {pipeline_mode = #tpu.pipeline_mode<synchronous>, transform_indices = @transform_1, window_bounds = array<i64: 128, 128>}, {pipeline_mode = #tpu.pipeline_mode<synchronous>, transform_indices = @transform_2, window_bounds = array<i64: 1, 128>}, {transform_indices = @transform_3, window_bounds = array<i64: 8, 128>}]} {
    %c0 = arith.constant 0 : index
    %c0_0 = arith.constant 0 : index
    %0 = vector.load %arg2[%c0, %c0_0] : memref<8x128xf32, #tpu.memory_space<vmem>>, vector<8x128xf32>
    %1 = arith.truncf %0 : vector<8x128xf32> to vector<8x128xbf16>
    %c0_1 = arith.constant 0 : index
    %c0_2 = arith.constant 0 : index
    %2 = vector.load %arg3[%c0_1, %c0_2] : memref<128x128xbf16, #tpu.memory_space<vmem>>, vector<128x128xbf16>
    %cst = arith.constant dense<0.000000e+00> : vector<8x128xf32>
    %3 = tpu.matmul %1, %2, %cst {dimension_numbers = #tpu.dot_dimension_numbers<[1], [0], [0], [1], [0, 0, 1, 1], [], []>} : vector<8x128xbf16>, vector<128x128xbf16>, vector<8x128xf32> -> vector<8x128xf32>
    %c0_3 = arith.constant 0 : index
    %c0_4 = arith.constant 0 : index
    %4 = vector.load %arg4[%c0_3, %c0_4] : memref<1x128xf32, #tpu.memory_space<vmem>>, vector<1x128xf32>
    %5 = vector.broadcast %4 : vector<1x128xf32> to vector<8x128xf32>
    %6 = arith.addf %3, %5 : vector<8x128xf32>
    %c0_5 = arith.constant 0 : index
    %c0_6 = arith.constant 0 : index
    %7 = vector.load %arg5[%c0_5, %c0_6] : memref<8x128xf32, #tpu.memory_space<vmem>>, vector<8x128xf32>
    tpu.vector_store %arg5[%c0_5, %c0_6], %6 {strides = array<i32>} : memref<8x128xf32, #tpu.memory_space<vmem>>, vector<8x128xf32>,
    return
  }
  func.func @transform_0(%arg0: i32, %arg1: i32) -> (i32, i32) {
    %c0_i32 = arith.constant 0 : i32
    %c0_i32_0 = arith.constant 0 : i32
    return %arg0, %c0_i32 : i32, i32
  }
  func.func @transform_1(%arg0: i32, %arg1: i32) -> (i32, i32) {
    %c0_i32 = arith.constant 0 : i32
    %c0_i32_0 = arith.constant 0 : i32
    return %c0_i32, %arg1 : i32, i32
  }
  func.func @transform_2(%arg0: i32, %arg1: i32) -> (i32, i32) {
    %c0_i32 = arith.constant 0 : i32
    %c0_i32_0 = arith.constant 0 : i32
    return %c0_i32, %arg1 : i32, i32
  }
  func.func @transform_3(%arg0: i32, %arg1: i32) -> (i32, i32) {
    %c0_i32 = arith.constant 0 : i32
    return %arg0, %arg1 : i32, i32
  }
}

</mosaic_0001>

<llo_original>
// kernel: tpu_custom_call.1
$region0: #{tpu_custom_call.1}
  #allocation0 [shape = 'u32[]', space=smem, size = 0x4, offset = 0x4, fixed_abs, tag = 'smem constant byte address 0x4 - core index']
  #allocation1 [shape = 'u32[144,128]{1,0:T(1,128)}', space=vmem, size = 0x12000, scoped, tag = 'internal scratch']
  %s0 = inlined_call_operand.hbm [shape: f32[16,128], index: 0, kind: input, shape index: {}]
  %s1 = inlined_call_operand.hbm [shape: bf16[128,128], index: 1, kind: input, shape index: {}]
  %s2 = inlined_call_operand.vmem [shape: f32[1,128], index: 2, kind: input, shape index: {}]
  %s3 = inlined_call_operand.hbm [shape: f32[16,128], index: 3, kind: output, shape index: {}]
  %s4 = sld [smem:[#allocation0]]
  $region53: #{tpu_custom_call.1} parent=0
    _
  %s6 = ssub.s32 1, %s4
  %s7 = scalar_select 0, %s6, %s4
  $region1: #{tpu_custom_call.1} parent=0
    #allocation2 [shape = 'u8[8192]{0}', space=vmem, size = 0x2000, scoped, tag = 'input window, operand 0']
    #allocation3 [shape = 's32[2]{0}', space=sflag, size = 0x8, scoped, tag = 'scoped memory for tpu_custom_call.1']
    #allocation4 [shape = 's32[2]{0}', space=sflag, size = 0x8, scoped, tag = 'scoped memory for tpu_custom_call.1']
    #allocation5 [shape = 'u8[32768]{0}', space=vmem, size = 0x8000, scoped, tag = 'input window, operand 1, single buffered']
    #allocation6 [shape = 's32[1]{0}', space=sflag, size = 0x4, scoped, tag = 'scoped memory for tpu_custom_call.1']
    #allocation7 [shape = 'u8[8192]{0}', space=vmem, size = 0x2000, scoped, tag = 'output window, operand 0']
    %8 = vsyncpa [#allocation3], 0
    %s9 = scalar_lea.sflag [#allocation3], 1
    %10 = vsyncpa %s9, 0
    %11 = vsyncpa [#allocation6], 0
    %12 = vsyncpa [#allocation4], 0
    %s13 = scalar_lea.sflag [#allocation4], 1
    %14 = vsyncpa %s13, 0
    loop: start=0, step=1, limit=4
    $region2: #{tpu_custom_call.1} parent=1 // loop_pre_header
      _
    $region3: #{tpu_custom_call.1} parent=1 // loop_header
      %s16 = sphi 0, %s20
      %p17 = scmp.ge.s32.totalorder %s16, 4
      %s23 = sphi 0, %s35
      %s24 = sphi 0, %s31
      %s25 = sphi 0, %s23
      %s26 = sphi 0, %s24
      %s27 = sphi 0, %s25
      %s28 = sphi 0, %s26
      %s38 = sphi 0, %s40
      %s41 = sphi 0, %s38
      %s42 = sphi 0, %s41
      %s58 = sphi 0, %s42
      %s64 = sphi 0, %s66
      %s67 = sphi 0, %s64
      %s68 = sphi 0, %s67
      %s84 = sphi 0, %s68
      %s90 = sphi 0, %s92
      %s93 = sphi 0, %s90
      %s94 = sphi 0, %s93
      %s110 = sphi 0, %s94
      %s118 = sphi 0, %s120
      %s121 = sphi 0, %s118
      %s122 = sphi 0, %s121
      %s138 = sphi 0, %s122
    $region4: #{tpu_custom_call.1} parent=1 // loop_header_branch
      %19 = sbr.rel (%p17) target = $region8
    $region5: #{tpu_custom_call.1} parent=1 // loop_body
      %s21 = ssub.s32 %s16, 1
      %s22 = ssub.s32 %s16, 2
      %s29 = sadd.s32 1, %s24
      %p30 = scmp.ge.s32.totalorder %s29, 1
      %s31 = scalar_select %p30, 0, %s29
      %s32 = sadd.s32 1, %s23
      %s33 = scalar_select %p30, %s32, %s23
      %p34 = scmp.ge.s32.totalorder %s33, 2
      %s35 = scalar_select %p34, 0, %s33
      %s36 = ssub.s32 %s23, %s35
      %p37 = scmp.eq.s32.totalorder %s36, 0
      %s39 = sadd.s32 %s38, 1
      %s40 = scalar_select %p37, %s38, %s39
      %p43 = pneg %p37
      %p44 = scmp.eq.s32.totalorder %s16, 1
      %p45 = por %p43, %p44
      %p46 = scmp.ne.s32.totalorder %s38, %s41
      %p47 = scmp.eq.s32.totalorder %s16, 0
      %p48 = por %p46, %p47
      %p49 = scmp.ne.s32.totalorder %s38, %s41
      %p50 = scmp.eq.s32.totalorder %s21, 1
      %p51 = por %p49, %p50
      %p52 = scmp.ne.s32.totalorder %s41, %s42
      %p53 = scmp.eq.s32.totalorder %s21, 0
      %p54 = por %p52, %p53
      %p55 = scmp.ne.s32.totalorder %s41, %s42
      %p56 = scmp.eq.s32.totalorder %s22, 1
      %p57 = por %p55, %p56
      %p59 = scmp.ne.s32.totalorder %s42, %s58
      %p60 = scmp.eq.s32.totalorder %s22, 0
      %p61 = por %p59, %p60
      %s62 = ssub.s32 %s24, %s31
      %p63 = scmp.eq.s32.totalorder %s62, 0
      %s65 = sadd.s32 %s64, 1
      %s66 = scalar_select %p63, %s64, %s65
      %p69 = pneg %p63
      %p70 = scmp.eq.s32.totalorder %s16, 1
      %p71 = por %p69, %p70
      %p72 = scmp.ne.s32.totalorder %s64, %s67
      %p73 = scmp.eq.s32.totalorder %s16, 0
      %p74 = por %p72, %p73
      %p75 = scmp.ne.s32.totalorder %s64, %s67
      %p76 = scmp.eq.s32.totalorder %s21, 1
      %p77 = por %p75, %p76
      %p78 = scmp.ne.s32.totalorder %s67, %s68
      %p79 = scmp.eq.s32.totalorder %s21, 0
      %p80 = por %p78, %p79
      %p81 = scmp.ne.s32.totalorder %s67, %s68
      %p82 = scmp.eq.s32.totalorder %s22, 1
      %p83 = por %p81, %p82
      %p85 = scmp.ne.s32.totalorder %s68, %s84
      %p86 = scmp.eq.s32.totalorder %s22, 0
      %p87 = por %p85, %p86
      %s88 = ssub.s32 %s24, %s31
      %p89 = scmp.eq.s32.totalorder %s88, 0
      %s91 = sadd.s32 %s90, 1
      %s92 = scalar_select %p89, %s90, %s91
      %p95 = pneg %p89
      %p96 = scmp.eq.s32.totalorder %s16, 1
      %p97 = por %p95, %p96
      %p98 = scmp.ne.s32.totalorder %s90, %s93
      %p99 = scmp.eq.s32.totalorder %s16, 0
      %p100 = por %p98, %p99
      %p101 = scmp.ne.s32.totalorder %s90, %s93
      %p102 = scmp.eq.s32.totalorder %s21, 1
      %p103 = por %p101, %p102
      %p104 = scmp.ne.s32.totalorder %s93, %s94
      %p105 = scmp.eq.s32.totalorder %s21, 0
      %p106 = por %p104, %p105
      %p107 = scmp.ne.s32.totalorder %s93, %s94
      %p108 = scmp.eq.s32.totalorder %s22, 1
      %p109 = por %p107, %p108
      %p111 = scmp.ne.s32.totalorder %s94, %s110
      %p112 = scmp.eq.s32.totalorder %s22, 0
      %p113 = por %p111, %p112
      %s114 = ssub.s32 %s23, %s35
      %s115 = ssub.s32 %s24, %s31
      %s116 = sor.u32 %s114, %s115
      %p117 = scmp.eq.s32.totalorder %s116, 0
      %s119 = sadd.s32 %s118, 1
      %s120 = scalar_select %p117, %s118, %s119
      %p123 = pneg %p117
      %p124 = scmp.eq.s32.totalorder %s16, 1
      %p125 = por %p123, %p124
      %p126 = scmp.ne.s32.totalorder %s118, %s121
      %p127 = scmp.eq.s32.totalorder %s16, 0
      %p128 = por %p126, %p127
      %p129 = scmp.ne.s32.totalorder %s118, %s121
      %p130 = scmp.eq.s32.totalorder %s21, 1
      %p131 = por %p129, %p130
      %p132 = scmp.ne.s32.totalorder %s121, %s122
      %p133 = scmp.eq.s32.totalorder %s21, 0
      %p134 = por %p132, %p133
      %p135 = scmp.ne.s32.totalorder %s121, %s122
      %p136 = scmp.eq.s32.totalorder %s22, 1
      %p137 = por %p135, %p136
      %p139 = scmp.ne.s32.totalorder %s122, %s138
      %p140 = scmp.eq.s32.totalorder %s22, 0
      %p141 = por %p139, %p140
      %p142 = scmp.le.s32.totalorder 1, %s16
      %p143 = scmp.lt.s32.totalorder %s16, 3
      %p144 = pnand %p142, %p143
      %p145 = pneg %p144
      // Predicated region
      $region9: #{tpu_custom_call.1} parent=5 // pred_check
        _
      $region10: #{tpu_custom_call.1} parent=5 // pred_check_branch
        %147 = sbr.rel (%p144) target = $region12
      $region11: #{tpu_custom_call.1} parent=5 // pred_region
        %s148 = ssub.s32 %s16, 1
        // Predicated region
        $region13: #{tpu_custom_call.1} parent=11 // pred_check
          %p149 = pneg %p80
        $region14: #{tpu_custom_call.1} parent=11 // pred_check_branch
          %151 = sbr.rel (%p149) target = $region16
        $region15: #{tpu_custom_call.1} parent=11 // pred_region
          %s153 = ssub.s32 1024, 1024
          %154 = vsyncadd [#allocation6], %s153
          %s155 = smul.addr %s26, 64
          %s156 = scalar_lea.hbm %s1, %s155
          %s157 = sshll.u32 [#allocation5], 4
          %s158 = int_to_ptr.vmem [resolvable:$true] %s157
          %163 = dma.hbm_to_vmem [thread:$0]  %s156, 1024, %s158, [#allocation6], 64, 64, 4
        $region16: #{tpu_custom_call.1} parent=11 // pred_fallthru
          _
        // Predicated region
        $region17: #{tpu_custom_call.1} parent=11 // pred_check
          %p164 = pneg %p106
        $region18: #{tpu_custom_call.1} parent=11 // pred_check_branch
          %166 = sbr.rel (%p164) target = $region20
        $region19: #{tpu_custom_call.1} parent=11 // pred_region
          %p167 = scmp.lt.s32.totalorder %s26, 0
          %s168 = scalar_select %p167, %s26, 0
          %s169 = scalar_lea.vmem %s2, %s168
        $region20: #{tpu_custom_call.1} parent=11 // pred_fallthru
          _
      $region12: #{tpu_custom_call.1} parent=5 // pred_fallthru
        _
      %p170 = scmp.lt.s32.totalorder %s16, 2
      // Predicated region
      $region21: #{tpu_custom_call.1} parent=5 // pred_check
        %p171 = pneg %p170
      $region22: #{tpu_custom_call.1} parent=5 // pred_check_branch
        %173 = sbr.rel (%p171) target = $region24
      $region23: #{tpu_custom_call.1} parent=5 // pred_region
        // Predicated region
        $region25: #{tpu_custom_call.1} parent=23 // pred_check
          %p174 = pneg %p48
        $region26: #{tpu_custom_call.1} parent=23 // pred_check_branch
          %176 = sbr.rel (%p174) target = $region28
        $region27: #{tpu_custom_call.1} parent=23 // pred_region
          %s177 = sand.u32 %s38, 1
          %s178 = scalar_lea.sflag [#allocation3], %s177
          %s179 = sand.u32 %s38, 1
          %s180 = smul.addr %s179, 8
          %s181 = scalar_lea.vmem [#allocation2], %s180
          %s183 = ssub.s32 128, 128
          %184 = vsyncadd %s178, %s183
          %s185 = smul.addr %s23, 128
          %s186 = scalar_lea.hbm %s0, %s185
          %s188 = sshll.u32 %s181, 4
          %s189 = int_to_ptr.vmem [resolvable:$true] %s188
          %191 = dma.hbm_to_vmem [thread:$0]  %s186, 128, %s189, %s178
        $region28: #{tpu_custom_call.1} parent=23 // pred_fallthru
          _
      $region24: #{tpu_custom_call.1} parent=5 // pred_fallthru
        _
      %p192 = scmp.le.s32.totalorder 1, %s16
      %p193 = scmp.lt.s32.totalorder %s16, 3
      %p194 = pnand %p192, %p193
      %p195 = pneg %p194
      // Predicated region
      $region29: #{tpu_custom_call.1} parent=5 // pred_check
        _
      $region30: #{tpu_custom_call.1} parent=5 // pred_check_branch
        %197 = sbr.rel (%p194) target = $region32
      $region31: #{tpu_custom_call.1} parent=5 // pred_region
        %s198 = ssub.s32 %s16, 1
        %s199 = sand.u32 %s41, 1
        %s200 = scalar_lea.sflag [#allocation3], %s199
        %s201 = sand.u32 %s41, 1
        %s202 = smul.addr %s201, 8
        %s203 = scalar_lea.vmem [#allocation2], %s202
        // Predicated region
        $region33: #{tpu_custom_call.1} parent=31 // pred_check
          %p204 = pneg %p54
        $region34: #{tpu_custom_call.1} parent=31 // pred_check_branch
          %206 = sbr.rel (%p204) target = $region36
        $region35: #{tpu_custom_call.1} parent=31 // pred_region
          %207 = dma.done %s200, 128
        $region36: #{tpu_custom_call.1} parent=31 // pred_fallthru
          _
        // Predicated region
        $region37: #{tpu_custom_call.1} parent=31 // pred_check
          %p208 = pneg %p80
        $region38: #{tpu_custom_call.1} parent=31 // pred_check_branch
          %210 = sbr.rel (%p208) target = $region40
        $region39: #{tpu_custom_call.1} parent=31 // pred_region
          %211 = dma.done [#allocation6], 1024
        $region40: #{tpu_custom_call.1} parent=31 // pred_fallthru
          _
        %s212 = sand.u32 %s41, 1
        %s213 = scalar_lea.sflag [#allocation3], %s212
        %s214 = sand.u32 %s41, 1
        %s215 = smul.addr %s214, 8
        %s216 = scalar_lea.vmem [#allocation2], %s215
        %p217 = pneg %p54
        %p218 = pneg %p51
        %p219 = pneg %p80
        %p220 = pneg %p77
        %p221 = scmp.lt.s32.totalorder %s26, 0
        %s222 = scalar_select %p221, %s26, 0
        %s223 = scalar_lea.vmem %s2, %s222
        %p224 = pneg %p106
        %p225 = pneg %p103
        %p226 = pneg %p134
        %p227 = pneg %p131
        %s228 = sand.u32 %s121, 1
        %s229 = scalar_lea.sflag [#allocation4], %s228
        %s230 = sand.u32 %s121, 1
        %s231 = smul.addr %s230, 8
        %s232 = scalar_lea.vmem [#allocation7], %s231
        %p233 = scmp.lt.s32.totalorder %s26, 0
        %s234 = scalar_select %p233, %s26, 0
        %s235 = scalar_lea.vmem %s2, %s234
        %v237 = vld [vmem:[%s203] sm:$0xff]
        %v238 = vpack.c.bf16 %v237, %v237
        %v239 = vld [vmem:[#allocation5] sm:$0xf]
        %v240 = vld [vmem:[#allocation5 + $0x4] sm:$0xf]
        %v241 = vld [vmem:[#allocation5 + $0x8] sm:$0xf]
        %v242 = vld [vmem:[#allocation5 + $0xc] sm:$0xf]
        %v243 = vld [vmem:[#allocation5 + $0x10] sm:$0xf]
        %v244 = vld [vmem:[#allocation5 + $0x14] sm:$0xf]
        %v245 = vld [vmem:[#allocation5 + $0x18] sm:$0xf]
        %v246 = vld [vmem:[#allocation5 + $0x1c] sm:$0xf]
        %v247 = vld [vmem:[#allocation5 + $0x20] sm:$0xf]
        %v248 = vld [vmem:[#allocation5 + $0x24] sm:$0xf]
        %v249 = vld [vmem:[#allocation5 + $0x28] sm:$0xf]
        %v250 = vld [vmem:[#allocation5 + $0x2c] sm:$0xf]
        %v251 = vld [vmem:[#allocation5 + $0x30] sm:$0xf]
        %v252 = vld [vmem:[#allocation5 + $0x34] sm:$0xf]
        %v253 = vld [vmem:[#allocation5 + $0x38] sm:$0xf]
        %v254 = vld [vmem:[#allocation5 + $0x3c] sm:$0xf]
        %v255 = vld [vmem:[%s235] sm:$0x1]
        %v257 = vlaneseq
        %v258 = vshrl.u32 %v257, 7
        %v259 = vsub.s32 0, %v258
        %v260 = vrot.slane %v255, %v259
        %v278 = vunpack.c.l.b16 %v239
        %v279 = vunpack.c.l.b16 %v240
        %v280 = vunpack.c.l.b16 %v241
        %v281 = vunpack.c.l.b16 %v242
        %v282 = vunpack.c.l.b16 %v243
        %v283 = vunpack.c.l.b16 %v244
        %v284 = vunpack.c.l.b16 %v245
        %v285 = vunpack.c.l.b16 %v246
        %v286 = vunpack.c.l.b16 %v247
        %v287 = vunpack.c.l.b16 %v248
        %v288 = vunpack.c.l.b16 %v249
        %v289 = vunpack.c.l.b16 %v250
        %v290 = vunpack.c.l.b16 %v251
        %v291 = vunpack.c.l.b16 %v252
        %v292 = vunpack.c.l.b16 %v253
        %v293 = vunpack.c.l.b16 %v254
        %v294 = vpack.c.b16 %v279, %v278
        %v295 = vpack.c.b16 %v281, %v280
        %v296 = vpack.c.b16 %v283, %v282
        %v297 = vpack.c.b16 %v285, %v284
        %v298 = vpack.c.b16 %v287, %v286
        %v299 = vpack.c.b16 %v289, %v288
        %v300 = vpack.c.b16 %v291, %v290
        %v301 = vpack.c.b16 %v293, %v292
        %310 = vmatprep.subr.bf16.mxu0 0
        %311 = vmatpush1.bf16.msra.mxu0 %v294
        %312 = vmatprep.subr.bf16.mxu0 0
        %313 = vmatpush1.bf16.msra.mxu0 %v295
        %314 = vmatprep.subr.bf16.mxu0 0
        %315 = vmatpush1.bf16.msra.mxu0 %v296
        %316 = vmatprep.subr.bf16.mxu0 0
        %317 = vmatpush1.bf16.msra.mxu0 %v297
        %318 = vmatprep.subr.bf16.mxu0 0
        %319 = vmatpush1.bf16.msra.mxu0 %v298
        %320 = vmatprep.subr.bf16.mxu0 0
        %321 = vmatpush1.bf16.msra.mxu0 %v299
        %322 = vmatprep.subr.bf16.mxu0 0
        %323 = vmatpush1.bf16.msra.mxu0 %v300
        %324 = vmatprep.subr.bf16.mxu0 0
        %325 = vmatpush1.bf16.msra.mxu0 %v301
        %326 = vmatprep.subr.bf16.mxu0 0
        %327 = vmatpush1.bf16.msra.mxu0 0
        %328 = vmatprep.subr.bf16.mxu0 0
        %329 = vmatpush1.bf16.msra.mxu0 0
        %330 = vmatprep.subr.bf16.mxu0 0
        %331 = vmatpush1.bf16.msra.mxu0 0
        %332 = vmatprep.subr.bf16.mxu0 0
        %333 = vmatpush1.bf16.msra.mxu0 0
        %334 = vmatprep.subr.bf16.mxu0 0
        %335 = vmatpush1.bf16.msra.mxu0 0
        %336 = vmatprep.subr.bf16.mxu0 0
        %337 = vmatpush1.bf16.msra.mxu0 0
        %338 = vmatprep.subr.bf16.mxu0 0
        %339 = vmatpush1.bf16.msra.mxu0 0
        %340 = vmatprep.subr.bf16.mxu0 0
        %341 = vmatpush1.bf16.msra.mxu0 0
        %342 = vmatprep.mubr.bf16.mxu0 0
        %343 = vmatmul.mubr.bf16.gmra.mrb[0].mxu0 %v238
        %v344 = vpop.f32.mrb[0].mxu0
        %v345 = vadd.f32 %v260, %v344
        %v346 = vpop.f32.mrb[0].mxu0
        %v347 = vpop.f32.mrb[0].mxu0
        %v348 = vpop.f32.mrb[0].mxu0
        %349 = vdwg.mxu0
        %350 = vst [vmem:[%s232] sm:$0xff] %v345
        %s351 = sand.u32 %s121, 1
        %s352 = scalar_lea.sflag [#allocation4], %s351
        %s353 = sand.u32 %s121, 1
        %s354 = smul.addr %s353, 8
        %s355 = scalar_lea.vmem [#allocation7], %s354
        // Predicated region
        $region41: #{tpu_custom_call.1} parent=31 // pred_check
          %p356 = pneg %p131
        $region42: #{tpu_custom_call.1} parent=31 // pred_check_branch
          %358 = sbr.rel (%p356) target = $region44
        $region43: #{tpu_custom_call.1} parent=31 // pred_region
          %s360 = ssub.s32 128, 128
          %361 = vsyncadd %s352, %s360
          %s362 = sadd.s32 %s26, %s25
          %s363 = smul.addr %s362, 128
          %s364 = scalar_lea.hbm %s3, %s363
          %s366 = sshll.u32 %s355, 4
          %s367 = int_to_ptr.vmem [resolvable:$true] %s366
          %369 = dma.vmem_to_hbm [thread:$0]  %s367, 128, %s364, %s352
        $region44: #{tpu_custom_call.1} parent=31 // pred_fallthru
          _
      $region32: #{tpu_custom_call.1} parent=5 // pred_fallthru
        _
      %p370 = scmp.le.s32.totalorder 2, %s16
      // Predicated region
      $region45: #{tpu_custom_call.1} parent=5 // pred_check
        %p371 = pneg %p370
      $region46: #{tpu_custom_call.1} parent=5 // pred_check_branch
        %373 = sbr.rel (%p371) target = $region48
      $region47: #{tpu_custom_call.1} parent=5 // pred_region
        %s374 = ssub.s32 %s16, 2
        // Predicated region
        $region49: #{tpu_custom_call.1} parent=47 // pred_check
          %p375 = pneg %p137
        $region50: #{tpu_custom_call.1} parent=47 // pred_check_branch
          %377 = sbr.rel (%p375) target = $region52
        $region51: #{tpu_custom_call.1} parent=47 // pred_region
          %s378 = sand.u32 %s122, 1
          %s379 = scalar_lea.sflag [#allocation4], %s378
          %s380 = sand.u32 %s122, 1
          %s381 = smul.addr %s380, 8
          %s382 = scalar_lea.vmem [#allocation7], %s381
          %383 = dma.done %s379, 128
        $region52: #{tpu_custom_call.1} parent=47 // pred_fallthru
          _
      $region48: #{tpu_custom_call.1} parent=5 // pred_fallthru
        _
    $region6: #{tpu_custom_call.1} parent=1 // loop_footer
      %s20 = sadd.s32 1, %s16
    $region7: #{tpu_custom_call.1} parent=1 // loop_footer_branch
      %15 = sbr.rel target = $region3
    $region8: #{tpu_custom_call.1} parent=1 // loop_exit
      _
    %384 = vsyncpa [#allocation3], 1
    %s385 = scalar_lea.sflag [#allocation3], 1
    %386 = vsyncpa %s385, 1
    %387 = vsyncpa [#allocation6], 1
    %388 = vsyncpa [#allocation4], 1
    %s389 = scalar_lea.sflag [#allocation4], 1
    %390 = vsyncpa %s389, 1

</llo_original>
